<compile_context>
chip_gen: v7x
topology: tpu7x:2x2x1
jax: 0.10.0
libtpu: 0.0.40
codegen_flags: <defaults>
</compile_context>

<pallas_src>
import functools

import jax
import jax.numpy as jnp
from jax.experimental import pallas as pl
from jax.experimental.pallas import tpu as pltpu

LANE = 128


def _round_up(n, m):
    return (n + m - 1) // m * m


def _pad_to(a, shape, dtype):
    """Zero-pad `a` up to `shape` and cast to `dtype`."""
    out = jnp.zeros(shape, dtype)
    return out.at[tuple(slice(0, s) for s in a.shape)].set(a.astype(dtype))


def _ae_kernel(alpha_ref,                                  # SMEM (4,) f32
               x_ref,                                      # (tb, d1p) compute dtype
               w1_ref, b1_ref, w2_ref, b2_ref, w3_ref, b3_ref,   # encoder
               w4_ref, b4_ref, w5_ref, b5_ref, w6_ref, b6_ref,   # decoder
               o_ref):                                     # (tb, d1p) f32
    cdt = x_ref.dtype  # MXU operand dtype (bf16 by default)

    def linear(h, w_ref, b_ref):
        # MXU matmul with f32 accumulation; bias add in f32.
        return jnp.dot(h, w_ref[...], preferred_element_type=jnp.float32) + b_ref[...]

    def prelu(h, a):
        # f32 elementwise (v5e VPU has no bf16).
        return jnp.where(h > 0, h, a * h)

    x = x_ref[...]
    # --- encoder ---
    h = prelu(linear(x, w1_ref, b1_ref), alpha_ref[0]).astype(cdt)
    h = prelu(linear(h, w2_ref, b2_ref), alpha_ref[1]).astype(cdt)
    z = linear(h, w3_ref, b3_ref).astype(cdt)              # latent, no activation
    # --- decoder ---
    h = prelu(linear(z, w4_ref, b4_ref), alpha_ref[2]).astype(cdt)
    h = prelu(linear(h, w5_ref, b5_ref), alpha_ref[3]).astype(cdt)
    o_ref[...] = linear(h, w6_ref, b6_ref).astype(o_ref.dtype)


@functools.partial(jax.jit, static_argnames=("block_b", "compute_dtype"))
def autoencoder_forward(x, params, *, block_b=512, compute_dtype=jnp.bfloat16):
    """Fused autoencoder forward.

    x: (B, d1) float32
    params: dict with w1..w6 (in,out ordered), b1..b6 (out,), alphas (4,) f32
    returns: (B, d1) float32 reconstruction
    """
    B, d1 = x.shape
    d2 = params["w1"].shape[1]
    d3 = params["w2"].shape[1]
    dl = params["w3"].shape[1]

    # Lane-dense padding of every feature dim to a multiple of 128.
    d1p = _round_up(d1, LANE)
    d2p = _round_up(d2, LANE)
    d3p = _round_up(d3, LANE)
    dlp = _round_up(dl, LANE)

    xp = _pad_to(x, (B, d1p), compute_dtype)

    w1 = _pad_to(params["w1"], (d1p, d2p), compute_dtype)
    w2 = _pad_to(params["w2"], (d2p, d3p), compute_dtype)
    w3 = _pad_to(params["w3"], (d3p, dlp), compute_dtype)
    w4 = _pad_to(params["w4"], (dlp, d3p), compute_dtype)
    w5 = _pad_to(params["w5"], (d3p, d2p), compute_dtype)
    w6 = _pad_to(params["w6"], (d2p, d1p), compute_dtype)

    b1 = _pad_to(params["b1"].reshape(1, -1), (1, d2p), jnp.float32)
    b2 = _pad_to(params["b2"].reshape(1, -1), (1, d3p), jnp.float32)
    b3 = _pad_to(params["b3"].reshape(1, -1), (1, dlp), jnp.float32)
    b4 = _pad_to(params["b4"].reshape(1, -1), (1, d3p), jnp.float32)
    b5 = _pad_to(params["b5"].reshape(1, -1), (1, d2p), jnp.float32)
    b6 = _pad_to(params["b6"].reshape(1, -1), (1, d1p), jnp.float32)

    alphas = params["alphas"].astype(jnp.float32)

    tb = min(block_b, B)                 # large batch tile; full B when B is small
    grid = (pl.cdiv(B, tb),)

    smem_spec = pl.BlockSpec(memory_space=pltpu.MemorySpace.SMEM)
    full = lambda r, c: pl.BlockSpec((r, c), lambda i: (0, 0))  # weight/bias resident

    out_p = pl.pallas_call(
        _ae_kernel,
        out_shape=jax.ShapeDtypeStruct((B, d1p), jnp.float32),
        grid_spec=pl.GridSpec(
            grid=grid,
            in_specs=[
                smem_spec,                                   # alphas (SMEM scalars)
                pl.BlockSpec((tb, d1p), lambda i: (i, 0)),   # x tile over batch
                full(d1p, d2p), full(1, d2p),                # encoder L1
                full(d2p, d3p), full(1, d3p),                # encoder L2
                full(d3p, dlp), full(1, dlp),                # encoder L3 (latent)
                full(dlp, d3p), full(1, d3p),                # decoder L1
                full(d3p, d2p), full(1, d2p),                # decoder L2
                full(d2p, d1p), full(1, d1p),                # decoder L3 (output)
            ],
            out_specs=pl.BlockSpec((tb, d1p), lambda i: (i, 0)),
        ),
        compiler_params=pltpu.CompilerParams(
            dimension_semantics=("parallel",)),
    )(alphas, xp, w1, b1, w2, b2, w3, b3, w4, b4, w5, b5, w6, b6)

    return out_p[:, :d1]


def init_params(key, d1, d2, d3, dl):
    """Deterministic PyTorch-style init: U(-1/sqrt(fan_in), 1/sqrt(fan_in))."""
    ks = jax.random.split(key, 12)

    def lin(kw, kb, fan_in, fan_out):
        bound = 1.0 / jnp.sqrt(jnp.float32(fan_in))
        w = jax.random.uniform(kw, (fan_in, fan_out), jnp.float32, -bound, bound)
        b = jax.random.uniform(kb, (fan_out,), jnp.float32, -bound, bound)
        return w, b

    w1, b1 = lin(ks[0], ks[1], d1, d2)
    w2, b2 = lin(ks[2], ks[3], d2, d3)
    w3, b3 = lin(ks[4], ks[5], d3, dl)
    w4, b4 = lin(ks[6], ks[7], dl, d3)
    w5, b5 = lin(ks[8], ks[9], d3, d2)
    w6, b6 = lin(ks[10], ks[11], d2, d1)
    # PReLU default: single learnable scalar per activation, init 0.25.
    alphas = jnp.full((4,), 0.25, jnp.float32)
    return {"w1": w1, "b1": b1, "w2": w2, "b2": b2, "w3": w3, "b3": b3,
            "w4": w4, "b4": b4, "w5": w5, "b5": b5, "w6": w6, "b6": b6,
            "alphas": alphas}


def reference_forward(x, p, compute_dtype=jnp.bfloat16):
    """Pure-JAX reference with the same dtype flow as the kernel."""
    def lin(h, w, b):
        return jnp.dot(h.astype(compute_dtype), w.astype(compute_dtype),
                       preferred_element_type=jnp.float32) + b

    def prelu(h, a):
        return jnp.where(h > 0, h, a * h)

    a = p["alphas"]
    h = prelu(lin(x, p["w1"], p["b1"]), a[0])
    h = prelu(lin(h, p["w2"], p["b2"]), a[1])
    z = lin(h, p["w3"], p["b3"])
    h = prelu(lin(z, p["w4"], p["b4"]), a[2])
    h = prelu(lin(h, p["w5"], p["b5"]), a[3])
    return lin(h, p["w6"], p["b6"])


if __name__ == "__main__":
    # nn_config: units_1st_layer=32, units_2nd_layer=64, units_3rd_layer=32,
    #            units_latent_layer=16; small demo batch.
    d1, d2, d3, dl = 32, 64, 32, 16
    B = 8

    key = jax.random.PRNGKey(0)
    kx, kp = jax.random.split(key)
    x = jax.random.normal(kx, (B, d1), jnp.float32)
    params = init_params(kp, d1, d2, d3, dl)

    out = autoencoder_forward(x, params)
    out = jax.block_until_ready(out)

    ref = reference_forward(x, params)
    assert out.shape == (B, d1)
    err = float(jnp.max(jnp.abs(out - ref)))
    assert jnp.allclose(out, ref, atol=1e-3, rtol=1e-3), f"mismatch vs reference (max abs err {err})"

    print("KERNEL_OK")
</pallas_src>

<mosaic_0001>
module attributes {stable_mosaic.version = 11 : i64} {
  func.func @_ae_kernel(%arg0: i32, %arg1: memref<4xf32, #tpu.memory_space<smem>>, %arg2: memref<8x128xbf16, #tpu.memory_space<vmem>>, %arg3: memref<128x128xbf16, #tpu.memory_space<vmem>>, %arg4: memref<1x128xf32, #tpu.memory_space<vmem>>, %arg5: memref<128x128xbf16, #tpu.memory_space<vmem>>, %arg6: memref<1x128xf32, #tpu.memory_space<vmem>>, %arg7: memref<128x128xbf16, #tpu.memory_space<vmem>>, %arg8: memref<1x128xf32, #tpu.memory_space<vmem>>, %arg9: memref<128x128xbf16, #tpu.memory_space<vmem>>, %arg10: memref<1x128xf32, #tpu.memory_space<vmem>>, %arg11: memref<128x128xbf16, #tpu.memory_space<vmem>>, %arg12: memref<1x128xf32, #tpu.memory_space<vmem>>, %arg13: memref<128x128xbf16, #tpu.memory_space<vmem>>, %arg14: memref<1x128xf32, #tpu.memory_space<vmem>>, %arg15: memref<8x128xf32, #tpu.memory_space<vmem>>) attributes {dimension_semantics = [#tpu.dimension_semantics<parallel>], iteration_bounds = array<i64: 1>, scalar_prefetch = 0 : i64, scratch_operands = 0 : i64, tpu.core_type = #tpu.core_type<tc>, window_params = [{transform_indices = @transform_0, window_bounds = array<i64: 4>}, {transform_indices = @transform_1, window_bounds = array<i64: 8, 128>}, {pipeline_mode = #tpu.pipeline_mode<synchronous>, transform_indices = @transform_2, window_bounds = array<i64: 128, 128>}, {pipeline_mode = #tpu.pipeline_mode<synchronous>, transform_indices = @transform_3, window_bounds = array<i64: 1, 128>}, {pipeline_mode = #tpu.pipeline_mode<synchronous>, transform_indices = @transform_4, window_bounds = array<i64: 128, 128>}, {pipeline_mode = #tpu.pipeline_mode<synchronous>, transform_indices = @transform_5, window_bounds = array<i64: 1, 128>}, {pipeline_mode = #tpu.pipeline_mode<synchronous>, transform_indices = @transform_6, window_bounds = array<i64: 128, 128>}, {pipeline_mode = #tpu.pipeline_mode<synchronous>, transform_indices = @transform_7, window_bounds = array<i64: 1, 128>}, {pipeline_mode = #tpu.pipeline_mode<synchronous>, transform_indices = @transform_8, window_bounds = array<i64: 128, 128>}, {pipeline_mode = #tpu.pipeline_mode<synchronous>, transform_indices = @transform_9, window_bounds = array<i64: 1, 128>}, {pipeline_mode = #tpu.pipeline_mode<synchronous>, transform_indices = @transform_10, window_bounds = array<i64: 128, 128>}, {pipeline_mode = #tpu.pipeline_mode<synchronous>, transform_indices = @transform_11, window_bounds = array<i64: 1, 128>}, {pipeline_mode = #tpu.pipeline_mode<synchronous>, transform_indices = @transform_12, window_bounds = array<i64: 128, 128>}, {pipeline_mode = #tpu.pipeline_mode<synchronous>, transform_indices = @transform_13, window_bounds = array<i64: 1, 128>}, {transform_indices = @transform_14, window_bounds = array<i64: 8, 128>}]} {
    %c0 = arith.constant 0 : index
    %c0_0 = arith.constant 0 : index
    %0 = vector.load %arg2[%c0, %c0_0] : memref<8x128xbf16, #tpu.memory_space<vmem>>, vector<8x128xbf16>
    %c0_1 = arith.constant 0 : index
    %c0_2 = arith.constant 0 : index
    %1 = vector.load %arg3[%c0_1, %c0_2] : memref<128x128xbf16, #tpu.memory_space<vmem>>, vector<128x128xbf16>
    %cst = arith.constant dense<0.000000e+00> : vector<8x128xf32>
    %2 = tpu.matmul %0, %1, %cst {dimension_numbers = #tpu.dot_dimension_numbers<[1], [0], [0], [1], [0, 0, 1, 1], [], []>} : vector<8x128xbf16>, vector<128x128xbf16>, vector<8x128xf32> -> vector<8x128xf32>
    %c0_3 = arith.constant 0 : index
    %c0_4 = arith.constant 0 : index
    %3 = vector.load %arg4[%c0_3, %c0_4] : memref<1x128xf32, #tpu.memory_space<vmem>>, vector<1x128xf32>
    %4 = vector.broadcast %3 : vector<1x128xf32> to vector<8x128xf32>
    %5 = arith.addf %2, %4 : vector<8x128xf32>
    %c0_5 = arith.constant 0 : index
    %6 = memref.load %arg1[%c0_5] : memref<4xf32, #tpu.memory_space<smem>>
    %cst_6 = arith.constant 0.000000e+00 : f32
    %7 = vector.broadcast %cst_6 : f32 to vector<8x128xf32>
    %8 = arith.cmpf ogt, %5, %7 : vector<8x128xf32>
    %9 = vector.broadcast %6 : f32 to vector<8x128xf32>
    %10 = arith.mulf %9, %5 : vector<8x128xf32>
    %11 = arith.select %8, %5, %10 : vector<8x128xi1>, vector<8x128xf32>
    %12 = arith.truncf %11 : vector<8x128xf32> to vector<8x128xbf16>
    %c0_7 = arith.constant 0 : index
    %c0_8 = arith.constant 0 : index
    %13 = vector.load %arg5[%c0_7, %c0_8] : memref<128x128xbf16, #tpu.memory_space<vmem>>, vector<128x128xbf16>
    %cst_9 = arith.constant dense<0.000000e+00> : vector<8x128xf32>
    %14 = tpu.matmul %12, %13, %cst_9 {dimension_numbers = #tpu.dot_dimension_numbers<[1], [0], [0], [1], [0, 0, 1, 1], [], []>} : vector<8x128xbf16>, vector<128x128xbf16>, vector<8x128xf32> -> vector<8x128xf32>
    %c0_10 = arith.constant 0 : index
    %c0_11 = arith.constant 0 : index
    %15 = vector.load %arg6[%c0_10, %c0_11] : memref<1x128xf32, #tpu.memory_space<vmem>>, vector<1x128xf32>
    %16 = vector.broadcast %15 : vector<1x128xf32> to vector<8x128xf32>
    %17 = arith.addf %14, %16 : vector<8x128xf32>
    %c1 = arith.constant 1 : index
    %18 = memref.load %arg1[%c1] : memref<4xf32, #tpu.memory_space<smem>>
    %cst_12 = arith.constant 0.000000e+00 : f32
    %19 = vector.broadcast %cst_12 : f32 to vector<8x128xf32>
    %20 = arith.cmpf ogt, %17, %19 : vector<8x128xf32>
    %21 = vector.broadcast %18 : f32 to vector<8x128xf32>
    %22 = arith.mulf %21, %17 : vector<8x128xf32>
    %23 = arith.select %20, %17, %22 : vector<8x128xi1>, vector<8x128xf32>
    %24 = arith.truncf %23 : vector<8x128xf32> to vector<8x128xbf16>
    %c0_13 = arith.constant 0 : index
    %c0_14 = arith.constant 0 : index
    %25 = vector.load %arg7[%c0_13, %c0_14] : memref<128x128xbf16, #tpu.memory_space<vmem>>, vector<128x128xbf16>
    %cst_15 = arith.constant dense<0.000000e+00> : vector<8x128xf32>
    %26 = tpu.matmul %24, %25, %cst_15 {dimension_numbers = #tpu.dot_dimension_numbers<[1], [0], [0], [1], [0, 0, 1, 1], [], []>} : vector<8x128xbf16>, vector<128x128xbf16>, vector<8x128xf32> -> vector<8x128xf32>
    %c0_16 = arith.constant 0 : index
    %c0_17 = arith.constant 0 : index
    %27 = vector.load %arg8[%c0_16, %c0_17] : memref<1x128xf32, #tpu.memory_space<vmem>>, vector<1x128xf32>
    %28 = vector.broadcast %27 : vector<1x128xf32> to vector<8x128xf32>
    %29 = arith.addf %26, %28 : vector<8x128xf32>
    %30 = arith.truncf %29 : vector<8x128xf32> to vector<8x128xbf16>
    %c0_18 = arith.constant 0 : index
    %c0_19 = arith.constant 0 : index
    %31 = vector.load %arg9[%c0_18, %c0_19] : memref<128x128xbf16, #tpu.memory_space<vmem>>, vector<128x128xbf16>
    %cst_20 = arith.constant dense<0.000000e+00> : vector<8x128xf32>
    %32 = tpu.matmul %30, %31, %cst_20 {dimension_numbers = #tpu.dot_dimension_numbers<[1], [0], [0], [1], [0, 0, 1, 1], [], []>} : vector<8x128xbf16>, vector<128x128xbf16>, vector<8x128xf32> -> vector<8x128xf32>
    %c0_21 = arith.constant 0 : index
    %c0_22 = arith.constant 0 : index
    %33 = vector.load %arg10[%c0_21, %c0_22] : memref<1x128xf32, #tpu.memory_space<vmem>>, vector<1x128xf32>
    %34 = vector.broadcast %33 : vector<1x128xf32> to vector<8x128xf32>
    %35 = arith.addf %32, %34 : vector<8x128xf32>
    %c2 = arith.constant 2 : index
    %36 = memref.load %arg1[%c2] : memref<4xf32, #tpu.memory_space<smem>>
    %cst_23 = arith.constant 0.000000e+00 : f32
    %37 = vector.broadcast %cst_23 : f32 to vector<8x128xf32>
    %38 = arith.cmpf ogt, %35, %37 : vector<8x128xf32>
    %39 = vector.broadcast %36 : f32 to vector<8x128xf32>
    %40 = arith.mulf %39, %35 : vector<8x128xf32>
    %41 = arith.select %38, %35, %40 : vector<8x128xi1>, vector<8x128xf32>
    %42 = arith.truncf %41 : vector<8x128xf32> to vector<8x128xbf16>
    %c0_24 = arith.constant 0 : index
    %c0_25 = arith.constant 0 : index
    %43 = vector.load %arg11[%c0_24, %c0_25] : memref<128x128xbf16, #tpu.memory_space<vmem>>, vector<128x128xbf16>
    %cst_26 = arith.constant dense<0.000000e+00> : vector<8x128xf32>
    %44 = tpu.matmul %42, %43, %cst_26 {dimension_numbers = #tpu.dot_dimension_numbers<[1], [0], [0], [1], [0, 0, 1, 1], [], []>} : vector<8x128xbf16>, vector<128x128xbf16>, vector<8x128xf32> -> vector<8x128xf32>
    %c0_27 = arith.constant 0 : index
    %c0_28 = arith.constant 0 : index
    %45 = vector.load %arg12[%c0_27, %c0_28] : memref<1x128xf32, #tpu.memory_space<vmem>>, vector<1x128xf32>
    %46 = vector.broadcast %45 : vector<1x128xf32> to vector<8x128xf32>
    %47 = arith.addf %44, %46 : vector<8x128xf32>
    %c3 = arith.constant 3 : index
    %48 = memref.load %arg1[%c3] : memref<4xf32, #tpu.memory_space<smem>>
    %cst_29 = arith.constant 0.000000e+00 : f32
    %49 = vector.broadcast %cst_29 : f32 to vector<8x128xf32>
    %50 = arith.cmpf ogt, %47, %49 : vector<8x128xf32>
    %51 = vector.broadcast %48 : f32 to vector<8x128xf32>
    %52 = arith.mulf %51, %47 : vector<8x128xf32>
    %53 = arith.select %50, %47, %52 : vector<8x128xi1>, vector<8x128xf32>
    %54 = arith.truncf %53 : vector<8x128xf32> to vector<8x128xbf16>
    %c0_30 = arith.constant 0 : index
    %c0_31 = arith.constant 0 : index
    %55 = vector.load %arg13[%c0_30, %c0_31] : memref<128x128xbf16, #tpu.memory_space<vmem>>, vector<128x128xbf16>
    %cst_32 = arith.constant dense<0.000000e+00> : vector<8x128xf32>
    %56 = tpu.matmul %54, %55, %cst_32 {dimension_numbers = #tpu.dot_dimension_numbers<[1], [0], [0], [1], [0, 0, 1, 1], [], []>} : vector<8x128xbf16>, vector<128x128xbf16>, vector<8x128xf32> -> vector<8x128xf32>
    %c0_33 = arith.constant 0 : index
    %c0_34 = arith.constant 0 : index
    %57 = vector.load %arg14[%c0_33, %c0_34] : memref<1x128xf32, #tpu.memory_space<vmem>>, vector<1x128xf32>
    %58 = vector.broadcast %57 : vector<1x128xf32> to vector<8x128xf32>
    %59 = arith.addf %56, %58 : vector<8x128xf32>
    %c0_35 = arith.constant 0 : index
    %c0_36 = arith.constant 0 : index
    %60 = vector.load %arg15[%c0_35, %c0_36] : memref<8x128xf32, #tpu.memory_space<vmem>>, vector<8x128xf32>
    tpu.vector_store %arg15[%c0_35, %c0_36], %59 {strides = array<i32>} : memref<8x128xf32, #tpu.memory_space<vmem>>, vector<8x128xf32>,
    return
  }
  func.func @transform_0(%arg0: i32) -> i32 {
    %c0_i32 = arith.constant 0 : i32
    %c0_i32_0 = arith.constant 0 : i32
    return %c0_i32 : i32
  }
  func.func @transform_1(%arg0: i32) -> (i32, i32) {
    %c0_i32 = arith.constant 0 : i32
    %c0_i32_0 = arith.constant 0 : i32
    return %arg0, %c0_i32 : i32, i32
  }
  func.func @transform_2(%arg0: i32) -> (i32, i32) {
    %c0_i32 = arith.constant 0 : i32
    %c0_i32_0 = arith.constant 0 : i32
    %c0_i32_1 = arith.constant 0 : i32
    return %c0_i32, %c0_i32_0 : i32, i32
  }
  func.func @transform_3(%arg0: i32) -> (i32, i32) {
    %c0_i32 = arith.constant 0 : i32
    %c0_i32_0 = arith.constant 0 : i32
    %c0_i32_1 = arith.constant 0 : i32
    return %c0_i32, %c0_i32_0 : i32, i32
  }
  func.func @transform_4(%arg0: i32) -> (i32, i32) {
    %c0_i32 = arith.constant 0 : i32
    %c0_i32_0 = arith.constant 0 : i32
    %c0_i32_1 = arith.constant 0 : i32
    return %c0_i32, %c0_i32_0 : i32, i32
  }
  func.func @transform_5(%arg0: i32) -> (i32, i32) {
    %c0_i32 = arith.constant 0 : i32
    %c0_i32_0 = arith.constant 0 : i32
    %c0_i32_1 = arith.constant 0 : i32
    return %c0_i32, %c0_i32_0 : i32, i32
  }
  func.func @transform_6(%arg0: i32) -> (i32, i32) {
    %c0_i32 = arith.constant 0 : i32
    %c0_i32_0 = arith.constant 0 : i32
    %c0_i32_1 = arith.constant 0 : i32
    return %c0_i32, %c0_i32_0 : i32, i32
  }
  func.func @transform_7(%arg0: i32) -> (i32, i32) {
    %c0_i32 = arith.constant 0 : i32
    %c0_i32_0 = arith.constant 0 : i32
    %c0_i32_1 = arith.constant 0 : i32
    return %c0_i32, %c0_i32_0 : i32, i32
  }
  func.func @transform_8(%arg0: i32) -> (i32, i32) {
    %c0_i32 = arith.constant 0 : i32
    %c0_i32_0 = arith.constant 0 : i32
    %c0_i32_1 = arith.constant 0 : i32
    return %c0_i32, %c0_i32_0 : i32, i32
  }
  func.func @transform_9(%arg0: i32) -> (i32, i32) {
    %c0_i32 = arith.constant 0 : i32
    %c0_i32_0 = arith.constant 0 : i32
    %c0_i32_1 = arith.constant 0 : i32
    return %c0_i32, %c0_i32_0 : i32, i32
  }
  func.func @transform_10(%arg0: i32) -> (i32, i32) {
    %c0_i32 = arith.constant 0 : i32
    %c0_i32_0 = arith.constant 0 : i32
    %c0_i32_1 = arith.constant 0 : i32
    return %c0_i32, %c0_i32_0 : i32, i32
  }
  func.func @transform_11(%arg0: i32) -> (i32, i32) {
    %c0_i32 = arith.constant 0 : i32
    %c0_i32_0 = arith.constant 0 : i32
    %c0_i32_1 = arith.constant 0 : i32
    return %c0_i32, %c0_i32_0 : i32, i32
  }
  func.func @transform_12(%arg0: i32) -> (i32, i32) {
    %c0_i32 = arith.constant 0 : i32
    %c0_i32_0 = arith.constant 0 : i32
    %c0_i32_1 = arith.constant 0 : i32
    return %c0_i32, %c0_i32_0 : i32, i32
  }
  func.func @transform_13(%arg0: i32) -> (i32, i32) {
    %c0_i32 = arith.constant 0 : i32
    %c0_i32_0 = arith.constant 0 : i32
    %c0_i32_1 = arith.constant 0 : i32
    return %c0_i32, %c0_i32_0 : i32, i32
  }
  func.func @transform_14(%arg0: i32) -> (i32, i32) {
    %c0_i32 = arith.constant 0 : i32
    %c0_i32_0 = arith.constant 0 : i32
    return %arg0, %c0_i32 : i32, i32
  }
}

</mosaic_0001>

<llo_original>
// kernel: autoencoder_forward.1
$region0: #{autoencoder_forward.1}
  #allocation0 [shape = 'u32[]', space=smem, size = 0x4, offset = 0x4, fixed_abs, tag = 'smem constant byte address 0x4 - core index']
  #allocation1 [shape = 'u32[144,128]{1,0:T(1,128)}', space=vmem, size = 0x12000, scoped, tag = 'internal scratch']
  %s0 = inlined_call_operand.vmem [shape: f32[4], index: 0, kind: input, shape index: {}]
  %s1 = inlined_call_operand.vmem [shape: bf16[8,128], index: 1, kind: input, shape index: {}]
  %s2 = inlined_call_operand.vmem [shape: bf16[128,128], index: 2, kind: input, shape index: {}]
  %s3 = inlined_call_operand.vmem [shape: f32[1,128], index: 3, kind: input, shape index: {}]
  %s4 = inlined_call_operand.vmem [shape: bf16[128,128], index: 4, kind: input, shape index: {}]
  %s5 = inlined_call_operand.vmem [shape: f32[1,128], index: 5, kind: input, shape index: {}]
  %s6 = inlined_call_operand.vmem [shape: bf16[128,128], index: 6, kind: input, shape index: {}]
  %s7 = inlined_call_operand.vmem [shape: f32[1,128], index: 7, kind: input, shape index: {}]
  %s8 = inlined_call_operand.vmem [shape: bf16[128,128], index: 8, kind: input, shape index: {}]
  %s9 = inlined_call_operand.vmem [shape: f32[1,128], index: 9, kind: input, shape index: {}]
  %s10 = inlined_call_operand.vmem [shape: bf16[128,128], index: 10, kind: input, shape index: {}]
  %s11 = inlined_call_operand.vmem [shape: f32[1,128], index: 11, kind: input, shape index: {}]
  %s12 = inlined_call_operand.vmem [shape: bf16[128,128], index: 12, kind: input, shape index: {}]
  %s13 = inlined_call_operand.vmem [shape: f32[1,128], index: 13, kind: input, shape index: {}]
  %s14 = inlined_call_operand.hbm [shape: f32[8,128], index: 14, kind: output, shape index: {}]
  %s15 = sld [smem:[#allocation0]]
  $region70: #{autoencoder_forward.1} parent=0
    _
  %s17 = ssub.s32 1, %s15
  %s18 = scalar_select 0, %s17, %s15
  $region1: #{autoencoder_forward.1} parent=0
    #allocation2 [shape = 'u8[512]{0}', space=smem, size = 0x200, scoped, tag = 'input window, operand 0, single buffered']
    #allocation3 [shape = 's32[1]{0}', space=sflag, size = 0x4, scoped, tag = 'scoped memory for autoencoder_forward.1']
    #allocation4 [shape = 's32[1]{0}', space=sflag, size = 0x4, scoped, tag = 'scoped memory for autoencoder_forward.1']
    #allocation5 [shape = 'u8[4096]{0}', space=vmem, size = 0x1000, scoped, tag = 'output window, operand 0, single buffered']
    %19 = vsyncpa [#allocation4], 0
    %20 = vsyncpa [#allocation3], 0
    // Predicated region
    $region2: #{autoencoder_forward.1} parent=1 // pred_check
      _
    $region3: #{autoencoder_forward.1} parent=1 // pred_check_branch
      %22 = sbr.rel (0) target = $region5
    $region4: #{autoencoder_forward.1} parent=1 // pred_region
      %s24 = ssub.s32 16, 16
      %25 = vsyncadd [#allocation4], %s24
      %s27 = sshll.u32 %s0, 4
      %s28 = int_to_ptr.vmem [resolvable:$true] %s27
      %30 = dma.vmem_to_smem %s28, 16, [#allocation2], [#allocation4]
    $region5: #{autoencoder_forward.1} parent=1 // pred_fallthru
      _
    // Predicated region
    $region6: #{autoencoder_forward.1} parent=1 // pred_check
      _
    $region7: #{autoencoder_forward.1} parent=1 // pred_check_branch
      %32 = sbr.rel (0) target = $region9
    $region8: #{autoencoder_forward.1} parent=1 // pred_region
      _
    $region9: #{autoencoder_forward.1} parent=1 // pred_fallthru
      _
    // Predicated region
    $region10: #{autoencoder_forward.1} parent=1 // pred_check
      _
    $region11: #{autoencoder_forward.1} parent=1 // pred_check_branch
      %34 = sbr.rel (0) target = $region13
    $region12: #{autoencoder_forward.1} parent=1 // pred_region
      _
    $region13: #{autoencoder_forward.1} parent=1 // pred_fallthru
      _
    // Predicated region
    $region14: #{autoencoder_forward.1} parent=1 // pred_check
      _
    $region15: #{autoencoder_forward.1} parent=1 // pred_check_branch
      %36 = sbr.rel (0) target = $region17
    $region16: #{autoencoder_forward.1} parent=1 // pred_region
      _
    $region17: #{autoencoder_forward.1} parent=1 // pred_fallthru
      _
    // Predicated region
    $region18: #{autoencoder_forward.1} parent=1 // pred_check
      _
    $region19: #{autoencoder_forward.1} parent=1 // pred_check_branch
      %38 = sbr.rel (0) target = $region21
    $region20: #{autoencoder_forward.1} parent=1 // pred_region
      _
    $region21: #{autoencoder_forward.1} parent=1 // pred_fallthru
      _
    // Predicated region
    $region22: #{autoencoder_forward.1} parent=1 // pred_check
      _
    $region23: #{autoencoder_forward.1} parent=1 // pred_check_branch
      %40 = sbr.rel (0) target = $region25
    $region24: #{autoencoder_forward.1} parent=1 // pred_region
      _
    $region25: #{autoencoder_forward.1} parent=1 // pred_fallthru
      _
    // Predicated region
    $region26: #{autoencoder_forward.1} parent=1 // pred_check
      _
    $region27: #{autoencoder_forward.1} parent=1 // pred_check_branch
      %42 = sbr.rel (0) target = $region29
    $region28: #{autoencoder_forward.1} parent=1 // pred_region
      _
    $region29: #{autoencoder_forward.1} parent=1 // pred_fallthru
      _
    // Predicated region
    $region30: #{autoencoder_forward.1} parent=1 // pred_check
      _
    $region31: #{autoencoder_forward.1} parent=1 // pred_check_branch
      %44 = sbr.rel (0) target = $region33
    $region32: #{autoencoder_forward.1} parent=1 // pred_region
      _
    $region33: #{autoencoder_forward.1} parent=1 // pred_fallthru
      _
    // Predicated region
    $region34: #{autoencoder_forward.1} parent=1 // pred_check
      _
    $region35: #{autoencoder_forward.1} parent=1 // pred_check_branch
      %46 = sbr.rel (0) target = $region37
    $region36: #{autoencoder_forward.1} parent=1 // pred_region
      _
    $region37: #{autoencoder_forward.1} parent=1 // pred_fallthru
      _
    // Predicated region
    $region38: #{autoencoder_forward.1} parent=1 // pred_check
      _
    $region39: #{autoencoder_forward.1} parent=1 // pred_check_branch
      %48 = sbr.rel (0) target = $region41
    $region40: #{autoencoder_forward.1} parent=1 // pred_region
      _
    $region41: #{autoencoder_forward.1} parent=1 // pred_fallthru
      _
    // Predicated region
    $region42: #{autoencoder_forward.1} parent=1 // pred_check
      _
    $region43: #{autoencoder_forward.1} parent=1 // pred_check_branch
      %50 = sbr.rel (0) target = $region45
    $region44: #{autoencoder_forward.1} parent=1 // pred_region
      _
    $region45: #{autoencoder_forward.1} parent=1 // pred_fallthru
      _
    // Predicated region
    $region46: #{autoencoder_forward.1} parent=1 // pred_check
      _
    $region47: #{autoencoder_forward.1} parent=1 // pred_check_branch
      %52 = sbr.rel (0) target = $region49
    $region48: #{autoencoder_forward.1} parent=1 // pred_region
      _
    $region49: #{autoencoder_forward.1} parent=1 // pred_fallthru
      _
    // Predicated region
    $region50: #{autoencoder_forward.1} parent=1 // pred_check
      _
    $region51: #{autoencoder_forward.1} parent=1 // pred_check_branch
      %54 = sbr.rel (0) target = $region53
    $region52: #{autoencoder_forward.1} parent=1 // pred_region
      _
    $region53: #{autoencoder_forward.1} parent=1 // pred_fallthru
      _
    // Predicated region
    $region54: #{autoencoder_forward.1} parent=1 // pred_check
      _
    $region55: #{autoencoder_forward.1} parent=1 // pred_check_branch
      %56 = sbr.rel (0) target = $region57
    $region56: #{autoencoder_forward.1} parent=1 // pred_region
      _
    $region57: #{autoencoder_forward.1} parent=1 // pred_fallthru
      _
    // Predicated region
    $region58: #{autoencoder_forward.1} parent=1 // pred_check
      _
    $region59: #{autoencoder_forward.1} parent=1 // pred_check_branch
      %58 = sbr.rel (0) target = $region61
    $region60: #{autoencoder_forward.1} parent=1 // pred_region
      %59 = dma.done [#allocation4], 16
    $region61: #{autoencoder_forward.1} parent=1 // pred_fallthru
      _
    %60 = sfence
    %v62 = vld [vmem:[%s1] sm:$0xf]
    %v63 = vld [vmem:[%s2] sm:$0xf]
    %v64 = vld [vmem:[%s2 + $0x4] sm:$0xf]
    %v65 = vld [vmem:[%s2 + $0x8] sm:$0xf]
    %v66 = vld [vmem:[%s2 + $0xc] sm:$0xf]
    %v67 = vld [vmem:[%s2 + $0x10] sm:$0xf]
    %v68 = vld [vmem:[%s2 + $0x14] sm:$0xf]
    %v69 = vld [vmem:[%s2 + $0x18] sm:$0xf]
    %v70 = vld [vmem:[%s2 + $0x1c] sm:$0xf]
    %v71 = vld [vmem:[%s2 + $0x20] sm:$0xf]
    %v72 = vld [vmem:[%s2 + $0x24] sm:$0xf]
    %v73 = vld [vmem:[%s2 + $0x28] sm:$0xf]
    %v74 = vld [vmem:[%s2 + $0x2c] sm:$0xf]
    %v75 = vld [vmem:[%s2 + $0x30] sm:$0xf]
    %v76 = vld [vmem:[%s2 + $0x34] sm:$0xf]
    %v77 = vld [vmem:[%s2 + $0x38] sm:$0xf]
    %v78 = vld [vmem:[%s2 + $0x3c] sm:$0xf]
    %v79 = vld [vmem:[%s3] sm:$0x1]
    %v81 = vlaneseq
    %v82 = vshrl.u32 %v81, 7
    %v83 = vsub.s32 0, %v82
    %v84 = vrot.slane %v79, %v83
    %v102 = vunpack.c.l.b16 %v63
    %v103 = vunpack.c.l.b16 %v64
    %v104 = vunpack.c.l.b16 %v65
    %v105 = vunpack.c.l.b16 %v66
    %v106 = vunpack.c.l.b16 %v67
    %v107 = vunpack.c.l.b16 %v68
    %v108 = vunpack.c.l.b16 %v69
    %v109 = vunpack.c.l.b16 %v70
    %v110 = vunpack.c.l.b16 %v71
    %v111 = vunpack.c.l.b16 %v72
    %v112 = vunpack.c.l.b16 %v73
    %v113 = vunpack.c.l.b16 %v74
    %v114 = vunpack.c.l.b16 %v75
    %v115 = vunpack.c.l.b16 %v76
    %v116 = vunpack.c.l.b16 %v77
    %v117 = vunpack.c.l.b16 %v78
    %v118 = vpack.c.b16 %v103, %v102
    %v119 = vpack.c.b16 %v105, %v104
    %v120 = vpack.c.b16 %v107, %v106
    %v121 = vpack.c.b16 %v109, %v108
    %v122 = vpack.c.b16 %v111, %v110
    %v123 = vpack.c.b16 %v113, %v112
    %v124 = vpack.c.b16 %v115, %v114
    %v125 = vpack.c.b16 %v117, %v116
    %134 = vmatprep.subr.bf16.mxu0 0
    %135 = vmatpush1.bf16.msra.mxu0 %v118
    %136 = vmatprep.subr.bf16.mxu0 0
    %137 = vmatpush1.bf16.msra.mxu0 %v119
    %138 = vmatprep.subr.bf16.mxu0 0
    %139 = vmatpush1.bf16.msra.mxu0 %v120
    %140 = vmatprep.subr.bf16.mxu0 0
    %141 = vmatpush1.bf16.msra.mxu0 %v121
    %142 = vmatprep.subr.bf16.mxu0 0
    %143 = vmatpush1.bf16.msra.mxu0 %v122
    %144 = vmatprep.subr.bf16.mxu0 0
    %145 = vmatpush1.bf16.msra.mxu0 %v123
    %146 = vmatprep.subr.bf16.mxu0 0
    %147 = vmatpush1.bf16.msra.mxu0 %v124
    %148 = vmatprep.subr.bf16.mxu0 0
    %149 = vmatpush1.bf16.msra.mxu0 %v125
    %150 = vmatprep.subr.bf16.mxu0 0
    %151 = vmatpush1.bf16.msra.mxu0 0
    %152 = vmatprep.subr.bf16.mxu0 0
    %153 = vmatpush1.bf16.msra.mxu0 0
    %154 = vmatprep.subr.bf16.mxu0 0
    %155 = vmatpush1.bf16.msra.mxu0 0
    %156 = vmatprep.subr.bf16.mxu0 0
    %157 = vmatpush1.bf16.msra.mxu0 0
    %158 = vmatprep.subr.bf16.mxu0 0
    %159 = vmatpush1.bf16.msra.mxu0 0
    %160 = vmatprep.subr.bf16.mxu0 0
    %161 = vmatpush1.bf16.msra.mxu0 0
    %162 = vmatprep.subr.bf16.mxu0 0
    %163 = vmatpush1.bf16.msra.mxu0 0
    %164 = vmatprep.subr.bf16.mxu0 0
    %165 = vmatpush1.bf16.msra.mxu0 0
    %166 = vmatprep.mubr.bf16.mxu0 0
    %167 = vmatmul.mubr.bf16.gmra.mrb[0].mxu0 %v62
    %v168 = vpop.f32.mrb[0].mxu0
    %v169 = vadd.f32 %v84, %v168
    %v170 = vpop.f32.mrb[0].mxu0
    %v171 = vpop.f32.mrb[0].mxu0
    %v172 = vpop.f32.mrb[0].mxu0
    %173 = vdwg.mxu0
    %s174 = sld [smem:[#allocation2]]
    %vm175 = vcmp.gt.f32.partialorder %v169, 0.0
    %v176 = vstv %s174
    %v177 = vmul.f32 %v176, %v169
    %v178 = vsel %vm175, %v169, %v177
    %v179 = vpack.c.bf16 %v178, %v178
    %v180 = vld [vmem:[%s4] sm:$0xf]
    %v181 = vld [vmem:[%s4 + $0x4] sm:$0xf]
    %v182 = vld [vmem:[%s4 + $0x8] sm:$0xf]
    %v183 = vld [vmem:[%s4 + $0xc] sm:$0xf]
    %v184 = vld [vmem:[%s4 + $0x10] sm:$0xf]
    %v185 = vld [vmem:[%s4 + $0x14] sm:$0xf]
    %v186 = vld [vmem:[%s4 + $0x18] sm:$0xf]
    %v187 = vld [vmem:[%s4 + $0x1c] sm:$0xf]
    %v188 = vld [vmem:[%s4 + $0x20] sm:$0xf]
    %v189 = vld [vmem:[%s4 + $0x24] sm:$0xf]
    %v190 = vld [vmem:[%s4 + $0x28] sm:$0xf]
    %v191 = vld [vmem:[%s4 + $0x2c] sm:$0xf]
    %v192 = vld [vmem:[%s4 + $0x30] sm:$0xf]
    %v193 = vld [vmem:[%s4 + $0x34] sm:$0xf]
    %v194 = vld [vmem:[%s4 + $0x38] sm:$0xf]
    %v195 = vld [vmem:[%s4 + $0x3c] sm:$0xf]
    %v196 = vld [vmem:[%s5] sm:$0x1]
    %v198 = vlaneseq
    %v199 = vshrl.u32 %v198, 7
    %v200 = vsub.s32 0, %v199
    %v201 = vrot.slane %v196, %v200
    %v219 = vunpack.c.l.b16 %v180
    %v220 = vunpack.c.l.b16 %v181
    %v221 = vunpack.c.l.b16 %v182
    %v222 = vunpack.c.l.b16 %v183
    %v223 = vunpack.c.l.b16 %v184
    %v224 = vunpack.c.l.b16 %v185
    %v225 = vunpack.c.l.b16 %v186
    %v226 = vunpack.c.l.b16 %v187
    %v227 = vunpack.c.l.b16 %v188
    %v228 = vunpack.c.l.b16 %v189
    %v229 = vunpack.c.l.b16 %v190
    %v230 = vunpack.c.l.b16 %v191
    %v231 = vunpack.c.l.b16 %v192
    %v232 = vunpack.c.l.b16 %v193
    %v233 = vunpack.c.l.b16 %v194
    %v234 = vunpack.c.l.b16 %v195
    %v235 = vpack.c.b16 %v220, %v219
    %v236 = vpack.c.b16 %v222, %v221
    %v237 = vpack.c.b16 %v224, %v223
    %v238 = vpack.c.b16 %v226, %v225
    %v239 = vpack.c.b16 %v228, %v227
    %v240 = vpack.c.b16 %v230, %v229
    %v241 = vpack.c.b16 %v232, %v231
    %v242 = vpack.c.b16 %v234, %v233
    %251 = vmatprep.subr.bf16.mxu0 0
    %252 = vmatpush1.bf16.msra.mxu0 %v235
    %253 = vmatprep.subr.bf16.mxu0 0
    %254 = vmatpush1.bf16.msra.mxu0 %v236
    %255 = vmatprep.subr.bf16.mxu0 0
    %256 = vmatpush1.bf16.msra.mxu0 %v237
    %257 = vmatprep.subr.bf16.mxu0 0
    %258 = vmatpush1.bf16.msra.mxu0 %v238
    %259 = vmatprep.subr.bf16.mxu0 0
    %260 = vmatpush1.bf16.msra.mxu0 %v239
    %261 = vmatprep.subr.bf16.mxu0 0
    %262 = vmatpush1.bf16.msra.mxu0 %v240
    %263 = vmatprep.subr.bf16.mxu0 0
    %264 = vmatpush1.bf16.msra.mxu0 %v241
    %265 = vmatprep.subr.bf16.mxu0 0
    %266 = vmatpush1.bf16.msra.mxu0 %v242
    %267 = vmatprep.subr.bf16.mxu0 0
    %268 = vmatpush1.bf16.msra.mxu0 0
    %269 = vmatprep.subr.bf16.mxu0 0
    %270 = vmatpush1.bf16.msra.mxu0 0
    %271 = vmatprep.subr.bf16.mxu0 0
    %272 = vmatpush1.bf16.msra.mxu0 0
    %273 = vmatprep.subr.bf16.mxu0 0
    %274 = vmatpush1.bf16.msra.mxu0 0
    %275 = vmatprep.subr.bf16.mxu0 0
    %276 = vmatpush1.bf16.msra.mxu0 0
    %277 = vmatprep.subr.bf16.mxu0 0
    %278 = vmatpush1.bf16.msra.mxu0 0
    %279 = vmatprep.subr.bf16.mxu0 0
    %280 = vmatpush1.bf16.msra.mxu0 0
    %281 = vmatprep.subr.bf16.mxu0 0
    %282 = vmatpush1.bf16.msra.mxu0 0
    %283 = vmatprep.mubr.bf16.mxu0 0
    %284 = vmatmul.mubr.bf16.gmra.mrb[0].mxu0 %v179
    %v285 = vpop.f32.mrb[0].mxu0
    %v286 = vadd.f32 %v201, %v285
    %v287 = vpop.f32.mrb[0].mxu0
    %v288 = vpop.f32.mrb[0].mxu0
    %v289 = vpop.f32.mrb[0].mxu0
    %290 = vdwg.mxu0
    %s291 = sld [smem:[#allocation2 + $0x1]]
    %vm292 = vcmp.gt.f32.partialorder %v286, 0.0
    %v293 = vstv %s291
    %v294 = vmul.f32 %v293, %v286
    %v295 = vsel %vm292, %v286, %v294
    %v296 = vpack.c.bf16 %v295, %v295
    %v297 = vld [vmem:[%s6] sm:$0xf]
    %v298 = vld [vmem:[%s6 + $0x4] sm:$0xf]
    %v299 = vld [vmem:[%s6 + $0x8] sm:$0xf]
    %v300 = vld [vmem:[%s6 + $0xc] sm:$0xf]
    %v301 = vld [vmem:[%s6 + $0x10] sm:$0xf]
    %v302 = vld [vmem:[%s6 + $0x14] sm:$0xf]
    %v303 = vld [vmem:[%s6 + $0x18] sm:$0xf]
    %v304 = vld [vmem:[%s6 + $0x1c] sm:$0xf]
    %v305 = vld [vmem:[%s6 + $0x20] sm:$0xf]
    %v306 = vld [vmem:[%s6 + $0x24] sm:$0xf]
    %v307 = vld [vmem:[%s6 + $0x28] sm:$0xf]
    %v308 = vld [vmem:[%s6 + $0x2c] sm:$0xf]
    %v309 = vld [vmem:[%s6 + $0x30] sm:$0xf]
    %v310 = vld [vmem:[%s6 + $0x34] sm:$0xf]
    %v311 = vld [vmem:[%s6 + $0x38] sm:$0xf]
    %v312 = vld [vmem:[%s6 + $0x3c] sm:$0xf]
    %v313 = vld [vmem:[%s7] sm:$0x1]
    %v315 = vlaneseq
    %v316 = vshrl.u32 %v315, 7
    %v317 = vsub.s32 0, %v316
    %v318 = vrot.slane %v313, %v317
    %v336 = vunpack.c.l.b16 %v297
    %v337 = vunpack.c.l.b16 %v298
    %v338 = vunpack.c.l.b16 %v299
    %v339 = vunpack.c.l.b16 %v300
    %v340 = vunpack.c.l.b16 %v301
    %v341 = vunpack.c.l.b16 %v302
    %v342 = vunpack.c.l.b16 %v303
    %v343 = vunpack.c.l.b16 %v304
    %v344 = vunpack.c.l.b16 %v305
    %v345 = vunpack.c.l.b16 %v306
    %v346 = vunpack.c.l.b16 %v307
    %v347 = vunpack.c.l.b16 %v308
    %v348 = vunpack.c.l.b16 %v309
    %v349 = vunpack.c.l.b16 %v310
    %v350 = vunpack.c.l.b16 %v311
    %v351 = vunpack.c.l.b16 %v312
    %v352 = vpack.c.b16 %v337, %v336
    %v353 = vpack.c.b16 %v339, %v338
    %v354 = vpack.c.b16 %v341, %v340
    %v355 = vpack.c.b16 %v343, %v342
    %v356 = vpack.c.b16 %v345, %v344
    %v357 = vpack.c.b16 %v347, %v346
    %v358 = vpack.c.b16 %v349, %v348
    %v359 = vpack.c.b16 %v351, %v350
    %368 = vmatprep.subr.bf16.mxu0 0
    %369 = vmatpush1.bf16.msra.mxu0 %v352
    %370 = vmatprep.subr.bf16.mxu0 0
    %371 = vmatpush1.bf16.msra.mxu0 %v353
    %372 = vmatprep.subr.bf16.mxu0 0
    %373 = vmatpush1.bf16.msra.mxu0 %v354
    %374 = vmatprep.subr.bf16.mxu0 0
    %375 = vmatpush1.bf16.msra.mxu0 %v355
    %376 = vmatprep.subr.bf16.mxu0 0
    %377 = vmatpush1.bf16.msra.mxu0 %v356
    %378 = vmatprep.subr.bf16.mxu0 0
    %379 = vmatpush1.bf16.msra.mxu0 %v357
    %380 = vmatprep.subr.bf16.mxu0 0
    %381 = vmatpush1.bf16.msra.mxu0 %v358
    %382 = vmatprep.subr.bf16.mxu0 0
    %383 = vmatpush1.bf16.msra.mxu0 %v359
    %384 = vmatprep.subr.bf16.mxu0 0
    %385 = vmatpush1.bf16.msra.mxu0 0
    %386 = vmatprep.subr.bf16.mxu0 0
    %387 = vmatpush1.bf16.msra.mxu0 0
    %388 = vmatprep.subr.bf16.mxu0 0
    %389 = vmatpush1.bf16.msra.mxu0 0
    %390 = vmatprep.subr.bf16.mxu0 0
    %391 = vmatpush1.bf16.msra.mxu0 0
    %392 = vmatprep.subr.bf16.mxu0 0
    %393 = vmatpush1.bf16.msra.mxu0 0
    %394 = vmatprep.subr.bf16.mxu0 0
    %395 = vmatpush1.bf16.msra.mxu0 0
    %396 = vmatprep.subr.bf16.mxu0 0
    %397 = vmatpush1.bf16.msra.mxu0 0
    %398 = vmatprep.subr.bf16.mxu0 0
    %399 = vmatpush1.bf16.msra.mxu0 0
    %400 = vmatprep.mubr.bf16.mxu0 0
    %401 = vmatmul.mubr.bf16.gmra.mrb[0].mxu0 %v296
    %v402 = vpop.f32.mrb[0].mxu0
    %v403 = vadd.f32 %v318, %v402
    %v404 = vpop.f32.mrb[0].mxu0
    %v405 = vpop.f32.mrb[0].mxu0
    %v406 = vpop.f32.mrb[0].mxu0
    %407 = vdwg.mxu0
    %v408 = vpack.c.bf16 %v403, %v403
    %v409 = vld [vmem:[%s8] sm:$0xf]
    %v410 = vld [vmem:[%s8 + $0x4] sm:$0xf]
    %v411 = vld [vmem:[%s8 + $0x8] sm:$0xf]
    %v412 = vld [vmem:[%s8 + $0xc] sm:$0xf]
    %v413 = vld [vmem:[%s8 + $0x10] sm:$0xf]
    %v414 = vld [vmem:[%s8 + $0x14] sm:$0xf]
    %v415 = vld [vmem:[%s8 + $0x18] sm:$0xf]
    %v416 = vld [vmem:[%s8 + $0x1c] sm:$0xf]
    %v417 = vld [vmem:[%s8 + $0x20] sm:$0xf]
    %v418 = vld [vmem:[%s8 + $0x24] sm:$0xf]
    %v419 = vld [vmem:[%s8 + $0x28] sm:$0xf]
    %v420 = vld [vmem:[%s8 + $0x2c] sm:$0xf]
    %v421 = vld [vmem:[%s8 + $0x30] sm:$0xf]
    %v422 = vld [vmem:[%s8 + $0x34] sm:$0xf]
    %v423 = vld [vmem:[%s8 + $0x38] sm:$0xf]
    %v424 = vld [vmem:[%s8 + $0x3c] sm:$0xf]
    %v425 = vld [vmem:[%s9] sm:$0x1]
    %v427 = vlaneseq
    %v428 = vshrl.u32 %v427, 7
    %v429 = vsub.s32 0, %v428
    %v430 = vrot.slane %v425, %v429
    %v448 = vunpack.c.l.b16 %v409
    %v449 = vunpack.c.l.b16 %v410
    %v450 = vunpack.c.l.b16 %v411
    %v451 = vunpack.c.l.b16 %v412
    %v452 = vunpack.c.l.b16 %v413
    %v453 = vunpack.c.l.b16 %v414
    %v454 = vunpack.c.l.b16 %v415
    %v455 = vunpack.c.l.b16 %v416
    %v456 = vunpack.c.l.b16 %v417
    %v457 = vunpack.c.l.b16 %v418
    %v458 = vunpack.c.l.b16 %v419
    %v459 = vunpack.c.l.b16 %v420
    %v460 = vunpack.c.l.b16 %v421
    %v461 = vunpack.c.l.b16 %v422
    %v462 = vunpack.c.l.b16 %v423
    %v463 = vunpack.c.l.b16 %v424
    %v464 = vpack.c.b16 %v449, %v448
    %v465 = vpack.c.b16 %v451, %v450
    %v466 = vpack.c.b16 %v453, %v452
    %v467 = vpack.c.b16 %v455, %v454
    %v468 = vpack.c.b16 %v457, %v456
    %v469 = vpack.c.b16 %v459, %v458
    %v470 = vpack.c.b16 %v461, %v460
    %v471 = vpack.c.b16 %v463, %v462
    %480 = vmatprep.subr.bf16.mxu0 0
    %481 = vmatpush1.bf16.msra.mxu0 %v464
    %482 = vmatprep.subr.bf16.mxu0 0
    %483 = vmatpush1.bf16.msra.mxu0 %v465
    %484 = vmatprep.subr.bf16.mxu0 0
    %485 = vmatpush1.bf16.msra.mxu0 %v466
    %486 = vmatprep.subr.bf16.mxu0 0
    %487 = vmatpush1.bf16.msra.mxu0 %v467
    %488 = vmatprep.subr.bf16.mxu0 0
    %489 = vmatpush1.bf16.msra.mxu0 %v468
    %490 = vmatprep.subr.bf16.mxu0 0
    %491 = vmatpush1.bf16.msra.mxu0 %v469
    %492 = vmatprep.subr.bf16.mxu0 0
    %493 = vmatpush1.bf16.msra.mxu0 %v470
    %494 = vmatprep.subr.bf16.mxu0 0
    %495 = vmatpush1.bf16.msra.mxu0 %v471
    %496 = vmatprep.subr.bf16.mxu0 0
    %497 = vmatpush1.bf16.msra.mxu0 0
    %498 = vmatprep.subr.bf16.mxu0 0
    %499 = vmatpush1.bf16.msra.mxu0 0
    %500 = vmatprep.subr.bf16.mxu0 0
    %501 = vmatpush1.bf16.msra.mxu0 0
    %502 = vmatprep.subr.bf16.mxu0 0
    %503 = vmatpush1.bf16.msra.mxu0 0
    %504 = vmatprep.subr.bf16.mxu0 0
    %505 = vmatpush1.bf16.msra.mxu0 0
    %506 = vmatprep.subr.bf16.mxu0 0
    %507 = vmatpush1.bf16.msra.mxu0 0
    %508 = vmatprep.subr.bf16.mxu0 0
    %509 = vmatpush1.bf16.msra.mxu0 0
    %510 = vmatprep.subr.bf16.mxu0 0
    %511 = vmatpush1.bf16.msra.mxu0 0
    %512 = vmatprep.mubr.bf16.mxu0 0
    %513 = vmatmul.mubr.bf16.gmra.mrb[0].mxu0 %v408
    %v514 = vpop.f32.mrb[0].mxu0
    %v515 = vadd.f32 %v430, %v514
    %v516 = vpop.f32.mrb[0].mxu0
    %v517 = vpop.f32.mrb[0].mxu0
    %v518 = vpop.f32.mrb[0].mxu0
    %519 = vdwg.mxu0
    %s520 = sld [smem:[#allocation2 + $0x2]]
    %vm521 = vcmp.gt.f32.partialorder %v515, 0.0
    %v522 = vstv %s520
    %v523 = vmul.f32 %v522, %v515
    %v524 = vsel %vm521, %v515, %v523
    %v525 = vpack.c.bf16 %v524, %v524
    %v526 = vld [vmem:[%s10] sm:$0xf]
    %v527 = vld [vmem:[%s10 + $0x4] sm:$0xf]
    %v528 = vld [vmem:[%s10 + $0x8] sm:$0xf]
    %v529 = vld [vmem:[%s10 + $0xc] sm:$0xf]
    %v530 = vld [vmem:[%s10 + $0x10] sm:$0xf]
    %v531 = vld [vmem:[%s10 + $0x14] sm:$0xf]
    %v532 = vld [vmem:[%s10 + $0x18] sm:$0xf]
    %v533 = vld [vmem:[%s10 + $0x1c] sm:$0xf]
    %v534 = vld [vmem:[%s10 + $0x20] sm:$0xf]
    %v535 = vld [vmem:[%s10 + $0x24] sm:$0xf]
    %v536 = vld [vmem:[%s10 + $0x28] sm:$0xf]
    %v537 = vld [vmem:[%s10 + $0x2c] sm:$0xf]
    %v538 = vld [vmem:[%s10 + $0x30] sm:$0xf]
    %v539 = vld [vmem:[%s10 + $0x34] sm:$0xf]
    %v540 = vld [vmem:[%s10 + $0x38] sm:$0xf]
    %v541 = vld [vmem:[%s10 + $0x3c] sm:$0xf]
    %v542 = vld [vmem:[%s11] sm:$0x1]
    %v544 = vlaneseq
    %v545 = vshrl.u32 %v544, 7
    %v546 = vsub.s32 0, %v545
    %v547 = vrot.slane %v542, %v546
    %v565 = vunpack.c.l.b16 %v526
    %v566 = vunpack.c.l.b16 %v527
    %v567 = vunpack.c.l.b16 %v528
    %v568 = vunpack.c.l.b16 %v529
    %v569 = vunpack.c.l.b16 %v530
    %v570 = vunpack.c.l.b16 %v531
    %v571 = vunpack.c.l.b16 %v532
    %v572 = vunpack.c.l.b16 %v533
    %v573 = vunpack.c.l.b16 %v534
    %v574 = vunpack.c.l.b16 %v535
    %v575 = vunpack.c.l.b16 %v536
    %v576 = vunpack.c.l.b16 %v537
    %v577 = vunpack.c.l.b16 %v538
    %v578 = vunpack.c.l.b16 %v539
    %v579 = vunpack.c.l.b16 %v540
    %v580 = vunpack.c.l.b16 %v541
    %v581 = vpack.c.b16 %v566, %v565
    %v582 = vpack.c.b16 %v568, %v567
    %v583 = vpack.c.b16 %v570, %v569
    %v584 = vpack.c.b16 %v572, %v571
    %v585 = vpack.c.b16 %v574, %v573
    %v586 = vpack.c.b16 %v576, %v575
    %v587 = vpack.c.b16 %v578, %v577
    %v588 = vpack.c.b16 %v580, %v579
    %597 = vmatprep.subr.bf16.mxu0 0
    %598 = vmatpush1.bf16.msra.mxu0 %v581
    %599 = vmatprep.subr.bf16.mxu0 0
    %600 = vmatpush1.bf16.msra.mxu0 %v582
    %601 = vmatprep.subr.bf16.mxu0 0
    %602 = vmatpush1.bf16.msra.mxu0 %v583
    %603 = vmatprep.subr.bf16.mxu0 0
    %604 = vmatpush1.bf16.msra.mxu0 %v584
    %605 = vmatprep.subr.bf16.mxu0 0
    %606 = vmatpush1.bf16.msra.mxu0 %v585
    %607 = vmatprep.subr.bf16.mxu0 0
    %608 = vmatpush1.bf16.msra.mxu0 %v586
    %609 = vmatprep.subr.bf16.mxu0 0
    %610 = vmatpush1.bf16.msra.mxu0 %v587
    %611 = vmatprep.subr.bf16.mxu0 0
    %612 = vmatpush1.bf16.msra.mxu0 %v588
    %613 = vmatprep.subr.bf16.mxu0 0
    %614 = vmatpush1.bf16.msra.mxu0 0
    %615 = vmatprep.subr.bf16.mxu0 0
    %616 = vmatpush1.bf16.msra.mxu0 0
    %617 = vmatprep.subr.bf16.mxu0 0
    %618 = vmatpush1.bf16.msra.mxu0 0
    %619 = vmatprep.subr.bf16.mxu0 0
    %620 = vmatpush1.bf16.msra.mxu0 0
    %621 = vmatprep.subr.bf16.mxu0 0
    %622 = vmatpush1.bf16.msra.mxu0 0
    %623 = vmatprep.subr.bf16.mxu0 0
    %624 = vmatpush1.bf16.msra.mxu0 0
    %625 = vmatprep.subr.bf16.mxu0 0
    %626 = vmatpush1.bf16.msra.mxu0 0
    %627 = vmatprep.subr.bf16.mxu0 0
    %628 = vmatpush1.bf16.msra.mxu0 0
    %629 = vmatprep.mubr.bf16.mxu0 0
    %630 = vmatmul.mubr.bf16.gmra.mrb[0].mxu0 %v525
    %v631 = vpop.f32.mrb[0].mxu0
    %v632 = vadd.f32 %v547, %v631
    %v633 = vpop.f32.mrb[0].mxu0
    %v634 = vpop.f32.mrb[0].mxu0
    %v635 = vpop.f32.mrb[0].mxu0
    %636 = vdwg.mxu0
    %s637 = sld [smem:[#allocation2 + $0x3]]
    %vm638 = vcmp.gt.f32.partialorder %v632, 0.0
    %v639 = vstv %s637
    %v640 = vmul.f32 %v639, %v632
    %v641 = vsel %vm638, %v632, %v640
    %v642 = vpack.c.bf16 %v641, %v641
    %v643 = vld [vmem:[%s12] sm:$0xf]
    %v644 = vld [vmem:[%s12 + $0x4] sm:$0xf]
    %v645 = vld [vmem:[%s12 + $0x8] sm:$0xf]
    %v646 = vld [vmem:[%s12 + $0xc] sm:$0xf]
    %v647 = vld [vmem:[%s12 + $0x10] sm:$0xf]
    %v648 = vld [vmem:[%s12 + $0x14] sm:$0xf]
    %v649 = vld [vmem:[%s12 + $0x18] sm:$0xf]
    %v650 = vld [vmem:[%s12 + $0x1c] sm:$0xf]
    %v651 = vld [vmem:[%s12 + $0x20] sm:$0xf]
    %v652 = vld [vmem:[%s12 + $0x24] sm:$0xf]
    %v653 = vld [vmem:[%s12 + $0x28] sm:$0xf]
    %v654 = vld [vmem:[%s12 + $0x2c] sm:$0xf]
    %v655 = vld [vmem:[%s12 + $0x30] sm:$0xf]
    %v656 = vld [vmem:[%s12 + $0x34] sm:$0xf]
    %v657 = vld [vmem:[%s12 + $0x38] sm:$0xf]
    %v658 = vld [vmem:[%s12 + $0x3c] sm:$0xf]
    %v659 = vld [vmem:[%s13] sm:$0x1]
    %v661 = vlaneseq
    %v662 = vshrl.u32 %v661, 7
    %v663 = vsub.s32 0, %v662
    %v664 = vrot.slane %v659, %v663
    %v682 = vunpack.c.l.b16 %v643
    %v683 = vunpack.c.l.b16 %v644
    %v684 = vunpack.c.l.b16 %v645
    %v685 = vunpack.c.l.b16 %v646
    %v686 = vunpack.c.l.b16 %v647
    %v687 = vunpack.c.l.b16 %v648
    %v688 = vunpack.c.l.b16 %v649
    %v689 = vunpack.c.l.b16 %v650
    %v690 = vunpack.c.l.b16 %v651
    %v691 = vunpack.c.l.b16 %v652
    %v692 = vunpack.c.l.b16 %v653
    %v693 = vunpack.c.l.b16 %v654
    %v694 = vunpack.c.l.b16 %v655
    %v695 = vunpack.c.l.b16 %v656
    %v696 = vunpack.c.l.b16 %v657
    %v697 = vunpack.c.l.b16 %v658
    %v698 = vpack.c.b16 %v683, %v682
    %v699 = vpack.c.b16 %v685, %v684
    %v700 = vpack.c.b16 %v687, %v686
    %v701 = vpack.c.b16 %v689, %v688
    %v702 = vpack.c.b16 %v691, %v690
    %v703 = vpack.c.b16 %v693, %v692
    %v704 = vpack.c.b16 %v695, %v694
    %v705 = vpack.c.b16 %v697, %v696
    %714 = vmatprep.subr.bf16.mxu0 0
    %715 = vmatpush1.bf16.msra.mxu0 %v698
    %716 = vmatprep.subr.bf16.mxu0 0
    %717 = vmatpush1.bf16.msra.mxu0 %v699
    %718 = vmatprep.subr.bf16.mxu0 0
    %719 = vmatpush1.bf16.msra.mxu0 %v700
    %720 = vmatprep.subr.bf16.mxu0 0
    %721 = vmatpush1.bf16.msra.mxu0 %v701
    %722 = vmatprep.subr.bf16.mxu0 0
    %723 = vmatpush1.bf16.msra.mxu0 %v702
    %724 = vmatprep.subr.bf16.mxu0 0
    %725 = vmatpush1.bf16.msra.mxu0 %v703
    %726 = vmatprep.subr.bf16.mxu0 0
    %727 = vmatpush1.bf16.msra.mxu0 %v704
    %728 = vmatprep.subr.bf16.mxu0 0
    %729 = vmatpush1.bf16.msra.mxu0 %v705
    %730 = vmatprep.subr.bf16.mxu0 0
    %731 = vmatpush1.bf16.msra.mxu0 0
    %732 = vmatprep.subr.bf16.mxu0 0
    %733 = vmatpush1.bf16.msra.mxu0 0
    %734 = vmatprep.subr.bf16.mxu0 0
    %735 = vmatpush1.bf16.msra.mxu0 0
    %736 = vmatprep.subr.bf16.mxu0 0
    %737 = vmatpush1.bf16.msra.mxu0 0
    %738 = vmatprep.subr.bf16.mxu0 0
    %739 = vmatpush1.bf16.msra.mxu0 0
    %740 = vmatprep.subr.bf16.mxu0 0
    %741 = vmatpush1.bf16.msra.mxu0 0
    %742 = vmatprep.subr.bf16.mxu0 0
    %743 = vmatpush1.bf16.msra.mxu0 0
    %744 = vmatprep.subr.bf16.mxu0 0
    %745 = vmatpush1.bf16.msra.mxu0 0
    %746 = vmatprep.mubr.bf16.mxu0 0
    %747 = vmatmul.mubr.bf16.gmra.mrb[0].mxu0 %v642
    %v748 = vpop.f32.mrb[0].mxu0
    %v749 = vadd.f32 %v664, %v748
    %v750 = vpop.f32.mrb[0].mxu0
    %v751 = vpop.f32.mrb[0].mxu0
    %v752 = vpop.f32.mrb[0].mxu0
    %753 = vdwg.mxu0
    %754 = vst [vmem:[#allocation5] sm:$0xff] %v749
    // Predicated region
    $region62: #{autoencoder_forward.1} parent=1 // pred_check
      _
    $region63: #{autoencoder_forward.1} parent=1 // pred_check_branch
      %756 = sbr.rel (0) target = $region65
    $region64: #{autoencoder_forward.1} parent=1 // pred_region
      %s758 = ssub.s32 128, 128
      %759 = vsyncadd [#allocation3], %s758
      %s761 = sshll.u32 [#allocation5], 4
      %s762 = int_to_ptr.vmem [resolvable:$true] %s761
      %764 = dma.vmem_to_hbm [thread:$0]  %s762, 128, %s14, [#allocation3]
    $region65: #{autoencoder_forward.1} parent=1 // pred_fallthru
      _
    // Predicated region
    $region66: #{autoencoder_forward.1} parent=1 // pred_check
      _
    $region67: #{autoencoder_forward.1} parent=1 // pred_check_branch
      %766 = sbr.rel (0) target = $region69
    $region68: #{autoencoder_forward.1} parent=1 // pred_region
      %767 = dma.done [#allocation3], 128
    $region69: #{autoencoder_forward.1} parent=1 // pred_fallthru
      _
    %768 = vsyncpa [#allocation3], 1
    %769 = vsyncpa [#allocation4], 1

</llo_original>
